<compile_context>
chip_gen: v5e
topology: v5e:2x2
jax: 0.10.0
libtpu: 0.0.40
codegen_flags: <defaults>
</compile_context>

<pallas_src>
import jax
import jax.numpy as jnp
from jax.experimental import pallas as pl
from jax.experimental.pallas import tpu as pltpu


def _expand_as(t, x):
    """Mirror of torch expand_as(): append trailing singleton dims up to x.ndim."""
    return t.reshape(t.shape + (1,) * (x.ndim - t.ndim))


def _scale_kernel(coef_ref, x_ref, o_ref):
    # coef_ref: (tile_rows, 2) in the compute dtype; col 0 = scale, col 1 = shift.
    # x_ref / o_ref: (tile_rows, tile_cols)
    scale = coef_ref[:, 0:1]
    shift = coef_ref[:, 1:2]
    x = x_ref[...].astype(scale.dtype)
    o_ref[...] = (x * scale + shift).astype(o_ref.dtype)


def _tpu_budgets():
    """(x-tile byte target, scoped vmem limit) based on the chip's VMEM size."""
    try:
        info = pltpu.get_tpu_info()
        vmem_cap = int(getattr(info, "vmem_capacity_bytes", 64 * 1024 * 1024))
    except Exception:  # no TPU info available -> be conservative (v7x-sized)
        vmem_cap = 64 * 1024 * 1024
    if vmem_cap <= 64 * 1024 * 1024:      # v7x: 64 MiB physical VMEM per TC
        return 4 << 20, 48 << 20
    return 8 << 20, 96 << 20              # v5e / v6e: 128 MiB physical VMEM


def _sublane_packing(itemsize):
    # 32-bit: 8 rows / vreg; 16-bit: 16; 8-bit: 32.
    return {4: 8, 2: 16, 1: 32}.get(itemsize, 8)


def _choose_tiles(total_rows, row_len, itemsize, sublane, target_bytes):
    """Pick (tile_rows, tile_cols) so one x block is ~target_bytes and TPU-legal."""
    row_bytes = row_len * itemsize
    if row_bytes * sublane <= target_bytes:
        # Row tiling only; keep the full (lane-dense) row in each block.
        tile_cols = row_len
        tile_rows = (target_bytes // row_bytes) // sublane * sublane
        tile_rows = max(sublane, tile_rows)
        if tile_rows >= total_rows:
            tile_rows = total_rows        # full extent: always legal
        return tile_rows, tile_cols
    # A single group of `sublane` rows already exceeds the budget: tile lanes too.
    tile_rows = min(total_rows, sublane)
    max_cols = max(128, target_bytes // (tile_rows * itemsize))
    tile_cols = min(row_len, (max_cols // 128) * 128)
    return tile_rows, tile_cols


def scale_forward(x, weight, bias):
    """Pallas equivalent of Scale.forward for NCHW inputs.

    x:      (N, C, H, W)
    weight: any shape that (after expand_as) broadcasts against x and is
            constant over H, W (e.g. (1, C), (1, C, 1, 1), scalar).
    bias:   same as weight.
    """
    N, C, H, W = x.shape
    w = _expand_as(weight, x)
    b = _expand_as(bias, x)
    if w.shape[-2:] != (1, 1) or b.shape[-2:] != (1, 1):
        # TODO(synk): per-pixel parameter shapes would need full-size VMEM
        # operands instead of per-row coefficients; not used by this model.
        raise NotImplementedError("Scale params must be constant over H, W")

    out_dtype = jnp.result_type(x.dtype, weight.dtype, bias.dtype)
    # Native bf16 math on chips with bf16 VPUs; otherwise f32 accumulation.
    compute_dtype = jnp.bfloat16 if out_dtype == jnp.bfloat16 else jnp.float32

    total_rows = N * C
    row_len = H * W

    # out = shift + scale * x, coefficients constant per (n, c) row.
    scale = jnp.broadcast_to((b - w).astype(compute_dtype), (N, C, 1, 1))
    shift = jnp.broadcast_to(w.astype(compute_dtype), (N, C, 1, 1))
    coef = jnp.concatenate(
        [scale.reshape(total_rows, 1), shift.reshape(total_rows, 1)], axis=1
    )  # (total_rows, 2): one fused operand instead of two lane-padded ones.

    x2d = x.reshape(total_rows, row_len)
    itemsize = x2d.dtype.itemsize
    sublane = _sublane_packing(itemsize)
    target_bytes, vmem_limit = _tpu_budgets()
    tile_rows, tile_cols = _choose_tiles(
        total_rows, row_len, itemsize, sublane, target_bytes
    )
    grid = (pl.cdiv(total_rows, tile_rows), pl.cdiv(row_len, tile_cols))

    elems = total_rows * row_len
    cost = pl.CostEstimate(
        flops=2 * elems,
        transcendentals=0,
        bytes_accessed=elems * (itemsize + jnp.dtype(out_dtype).itemsize)
        + coef.size * coef.dtype.itemsize,
    )

    out2d = pl.pallas_call(
        _scale_kernel,
        out_shape=jax.ShapeDtypeStruct((total_rows, row_len), out_dtype),
        grid=grid,
        in_specs=[
            pl.BlockSpec((tile_rows, 2), lambda r, c: (r, 0)),
            pl.BlockSpec((tile_rows, tile_cols), lambda r, c: (r, c)),
        ],
        out_specs=pl.BlockSpec((tile_rows, tile_cols), lambda r, c: (r, c)),
        compiler_params=pltpu.CompilerParams(
            dimension_semantics=("parallel", "parallel"),
            vmem_limit_bytes=vmem_limit,
        ),
        cost_estimate=cost,
    )(coef, x2d)

    return out2d.reshape(N, C, H, W)


if __name__ == "__main__":
    # Deterministic setup. Module __init__: weight = zeros(shape), bias =
    # ones(shape); perturb them so the kernel does nontrivial work.
    # shape = (1, C): expand_as appends two trailing singleton dims ->
    # per-channel broadcast over the NCHW input.
    N, C, H, W = 2, 4, 16, 16
    key = jax.random.PRNGKey(0)
    kx, kw, kb = jax.random.split(key, 3)

    x = jax.random.normal(kx, (N, C, H, W), dtype=jnp.float32)
    weight = jnp.zeros((1, C), jnp.float32) + 0.1 * jax.random.normal(kw, (1, C), jnp.float32)
    bias = jnp.ones((1, C), jnp.float32) + 0.1 * jax.random.normal(kb, (1, C), jnp.float32)

    out = scale_forward(x, weight, bias)
    out = jax.block_until_ready(out)

    # Reference check (plain JAX, mirrors the PyTorch forward exactly).
    w_e = _expand_as(weight, x)
    b_e = _expand_as(bias, x)
    ref = w_e + (b_e - w_e) * x

    assert out.shape == (N, C, H, W)
    assert out.dtype == x.dtype
    assert jnp.allclose(out, ref, atol=1e-6, rtol=1e-6)

    print("KERNEL_OK")
</pallas_src>

<mosaic_0001>
module attributes {stable_mosaic.version = 11 : i64} {
  func.func @_scale_kernel(%arg0: i32, %arg1: i32, %arg2: memref<8x2xf32, #tpu.memory_space<vmem>>, %arg3: memref<8x256xf32, #tpu.memory_space<vmem>>, %arg4: memref<8x256xf32, #tpu.memory_space<vmem>>) attributes {dimension_semantics = [#tpu.dimension_semantics<parallel>, #tpu.dimension_semantics<parallel>], iteration_bounds = array<i64: 1, 1>, scalar_prefetch = 0 : i64, scratch_operands = 0 : i64, tpu.core_type = #tpu.core_type<tc>, window_params = [{transform_indices = @transform_0, window_bounds = array<i64: 8, 2>}, {transform_indices = @transform_1, window_bounds = array<i64: 8, 256>}, {transform_indices = @transform_2, window_bounds = array<i64: 8, 256>}]} {
    %c0 = arith.constant 0 : index
    %c0_0 = arith.constant 0 : index
    %0 = vector.load %arg2[%c0, %c0_0] : memref<8x2xf32, #tpu.memory_space<vmem>>, vector<8x1xf32>
    %c0_1 = arith.constant 0 : index
    %c1 = arith.constant 1 : index
    %1 = vector.load %arg2[%c0_1, %c1] : memref<8x2xf32, #tpu.memory_space<vmem>>, vector<8x1xf32>
    %c0_2 = arith.constant 0 : index
    %c0_3 = arith.constant 0 : index
    %2 = vector.load %arg3[%c0_2, %c0_3] : memref<8x256xf32, #tpu.memory_space<vmem>>, vector<8x256xf32>
    %3 = vector.broadcast %0 : vector<8x1xf32> to vector<8x256xf32>
    %4 = arith.mulf %2, %3 : vector<8x256xf32>
    %5 = vector.broadcast %1 : vector<8x1xf32> to vector<8x256xf32>
    %6 = arith.addf %4, %5 : vector<8x256xf32>
    %c0_4 = arith.constant 0 : index
    %c0_5 = arith.constant 0 : index
    %7 = vector.load %arg4[%c0_4, %c0_5] : memref<8x256xf32, #tpu.memory_space<vmem>>, vector<8x256xf32>
    tpu.vector_store %arg4[%c0_4, %c0_5], %6 {strides = array<i32>} : memref<8x256xf32, #tpu.memory_space<vmem>>, vector<8x256xf32>,
    return
  }
  func.func @transform_0(%arg0: i32, %arg1: i32) -> (i32, i32) {
    %c0_i32 = arith.constant 0 : i32
    %c0_i32_0 = arith.constant 0 : i32
    return %arg0, %c0_i32 : i32, i32
  }
  func.func @transform_1(%arg0: i32, %arg1: i32) -> (i32, i32) {
    %c0_i32 = arith.constant 0 : i32
    return %arg0, %arg1 : i32, i32
  }
  func.func @transform_2(%arg0: i32, %arg1: i32) -> (i32, i32) {
    %c0_i32 = arith.constant 0 : i32
    return %arg0, %arg1 : i32, i32
  }
}

</mosaic_0001>

<llo_original>
// kernel: tpu_custom_call.1
$region0: #{tpu_custom_call.1}
  #allocation0 [shape = 'u32[]', space=smem, size = 0x4, offset = 0x4, fixed_abs, tag = 'smem constant byte address 0x4 - core index']
  #allocation1 [shape = 'u32[72,128]{1,0:T(1,128)}', space=vmem, size = 0x9000, scoped, tag = 'internal scratch']
  %s0 = inlined_call_operand.vmem [shape: f32[8,2], index: 0, kind: input, shape index: {}]
  %s1 = inlined_call_operand.hbm [shape: f32[8,256], index: 1, kind: input, shape index: {}]
  %s2 = inlined_call_operand.hbm [shape: f32[8,256], index: 2, kind: output, shape index: {}]
  %s3 = sld [smem:[#allocation0]]
  $region22: #{tpu_custom_call.1} parent=0
    _
  %s5 = ssub.s32 1, %s3
  %s6 = scalar_select 0, %s5, %s3
  $region1: #{tpu_custom_call.1} parent=0
    #allocation2 [shape = 'u8[8192]{0}', space=vmem, size = 0x2000, scoped, tag = 'input window, operand 1, single buffered']
    #allocation3 [shape = 's32[1]{0}', space=sflag, size = 0x4, scoped, tag = 'scoped memory for tpu_custom_call.1']
    #allocation4 [shape = 's32[1]{0}', space=sflag, size = 0x4, scoped, tag = 'scoped memory for tpu_custom_call.1']
    #allocation5 [shape = 'u8[8192]{0}', space=vmem, size = 0x2000, scoped, tag = 'output window, operand 0, single buffered']
    %7 = vsyncpa [#allocation3], 0
    %8 = vsyncpa [#allocation4], 0
    // Predicated region
    $region2: #{tpu_custom_call.1} parent=1 // pred_check
      _
    $region3: #{tpu_custom_call.1} parent=1 // pred_check_branch
      %10 = sbr.rel (0) target = $region5
    $region4: #{tpu_custom_call.1} parent=1 // pred_region
      _
    $region5: #{tpu_custom_call.1} parent=1 // pred_fallthru
      _
    // Predicated region
    $region6: #{tpu_custom_call.1} parent=1 // pred_check
      _
    $region7: #{tpu_custom_call.1} parent=1 // pred_check_branch
      %12 = sbr.rel (0) target = $region9
    $region8: #{tpu_custom_call.1} parent=1 // pred_region
      %14 = vsyncadd [#allocation3], 0
      %s16 = sshll.u32 %s1, 4
      %s17 = int_to_ptr.hbm [resolvable:$true] %s16
      %s18 = sshll.u32 [#allocation2], 4
      %s19 = int_to_ptr.vmem [resolvable:$true] %s18
      %21 = dma.hbm_to_vmem [thread:$0]  %s17, 256, %s19, [#allocation3]
    $region9: #{tpu_custom_call.1} parent=1 // pred_fallthru
      _
    // Predicated region
    $region10: #{tpu_custom_call.1} parent=1 // pred_check
      _
    $region11: #{tpu_custom_call.1} parent=1 // pred_check_branch
      %23 = sbr.rel (0) target = $region13
    $region12: #{tpu_custom_call.1} parent=1 // pred_region
      %25 = dma.done [#allocation3], 256
    $region13: #{tpu_custom_call.1} parent=1 // pred_fallthru
      _
    %v26 = vld [vmem:[%s0] sm:$0xff]
    %v27 = vld [vmem:[#allocation2] sm:$0xff]
    %v28 = vld [vmem:[#allocation2 + $0x8] sm:$0xff]
    %30 = vset.pattern.permute.xlu0 0
    %31 = vperm.xlu0 %30, %v26
    %v32 = vpop.permute.xlu0 %31
    %v34 = vmul.f32 %v27, %v32
    %v35 = vmul.f32 %v28, %v32
    %36 = vset.pattern.permute.xlu0 1
    %37 = vperm.xlu0 %36, %v26
    %v38 = vpop.permute.xlu0 %37
    %v40 = vadd.f32 %v34, %v38
    %v41 = vadd.f32 %v35, %v38
    %42 = vst [vmem:[#allocation5] sm:$0xff] %v40
    %43 = vst [vmem:[#allocation5 + $0x8] sm:$0xff] %v41
    // Predicated region
    $region14: #{tpu_custom_call.1} parent=1 // pred_check
      _
    $region15: #{tpu_custom_call.1} parent=1 // pred_check_branch
      %45 = sbr.rel (0) target = $region17
    $region16: #{tpu_custom_call.1} parent=1 // pred_region
      %47 = vsyncadd [#allocation4], 0
      %s49 = sshll.u32 [#allocation5], 4
      %s50 = int_to_ptr.vmem [resolvable:$true] %s49
      %s51 = sshll.u32 %s2, 4
      %s52 = int_to_ptr.hbm [resolvable:$true] %s51
      %54 = dma.vmem_to_hbm [thread:$0]  %s50, 256, %s52, [#allocation4]
    $region17: #{tpu_custom_call.1} parent=1 // pred_fallthru
      _
    // Predicated region
    $region18: #{tpu_custom_call.1} parent=1 // pred_check
      _
    $region19: #{tpu_custom_call.1} parent=1 // pred_check_branch
      %56 = sbr.rel (0) target = $region21
    $region20: #{tpu_custom_call.1} parent=1 // pred_region
      %58 = dma.done [#allocation4], 256
    $region21: #{tpu_custom_call.1} parent=1 // pred_fallthru
      _
    %59 = vsyncpa [#allocation3], 1
    %60 = vsyncpa [#allocation4], 1

</llo_original>
